<compile_context>
chip_gen: v7x
topology: tpu7x:2x2x1
jax: 0.10.0
libtpu: 0.0.40
codegen_flags: <defaults>
</compile_context>

<pallas_src>
import functools

import jax
import jax.numpy as jnp
from jax.experimental import pallas as pl
from jax.experimental.pallas import tpu as pltpu

S_SCALE = 15.0     # HELoss.__init__ hard-codes self.s = 15
NEG_PAD = -1.0e4   # masked columns: exp(S_SCALE * NEG_PAD - m) == 0 in f32


def _heloss_kernel(cm_ref, labels_ref, logits_ref, out_ref,
                   m_ref, l_ref, t_ref, *,
                   n_true, c_true, tile_n, tile_c, num_c, mask_cols, mask_rows):
    i = pl.program_id(0)   # batch tile
    j = pl.program_id(1)   # class chunk (reduction axis, "arbitrary")

    @pl.when(j == 0)
    def _init():
        m_ref[...] = jnp.full((tile_n, 1), -jnp.inf, jnp.float32)
        l_ref[...] = jnp.zeros((tile_n, 1), jnp.float32)
        t_ref[...] = jnp.zeros((tile_n, 1), jnp.float32)

    x = logits_ref[...].astype(jnp.float32)          # (tile_n, tile_c), single f32 view
    labels = labels_ref[...]                         # (tile_n, 1) int32

    col = jax.lax.broadcasted_iota(jnp.int32, (tile_n, tile_c), 1)
    if num_c > 1:
        col = col + j * tile_c                       # global column index
    if mask_cols:
        # last class chunk is partial: neutralize out-of-range lanes before max/exp
        x = jnp.where(col < c_true, x, NEG_PAD)

    # target logit for this chunk (zero unless the label column lives in it).
    # Precondition: 0 <= labels[i] < C (PyTorch gather would error otherwise).
    t_chunk = jnp.sum(jnp.where(col == labels, x, 0.0), axis=1, keepdims=True)

    # online (flash-softmax style) accumulation in scaled units
    m_old = m_ref[...]
    m_new = jnp.maximum(m_old, S_SCALE * jnp.max(x, axis=1, keepdims=True))
    e = jnp.exp(S_SCALE * x - m_new)                 # exponent <= 0: no overflow
    l_ref[...] = jnp.exp(m_old - m_new) * l_ref[...] + jnp.sum(e, axis=1, keepdims=True)
    m_ref[...] = m_new
    t_ref[...] = t_ref[...] + t_chunk

    @pl.when(j == num_c - 1)
    def _finalize():
        t = t_ref[...]                               # logits[i, labels[i]]
        m = m_ref[...]                               # row max of s*logits
        l = l_ref[...]                               # sum_j exp(s*logits_j - m)
        numerator = S_SCALE * (t - cm_ref[0])
        # exclude the target column; clamp guards f32 cancellation when the
        # target dominates the row
        sum_excl = jnp.maximum(l - jnp.exp(S_SCALE * t - m), 0.0)
        shift = jnp.maximum(numerator, m)            # overflow-safe log-sum-exp
        denom = jnp.exp(numerator - shift) + jnp.exp(m - shift) * sum_excl
        per_sample = numerator - (shift + jnp.log(denom))      # (tile_n, 1)
        if mask_rows:
            # rows past N in the (partial) last batch block are don't-cares
            row = i * tile_n + jax.lax.broadcasted_iota(jnp.int32, (tile_n, 1), 0)
            per_sample = jnp.where(row < n_true, per_sample, 0.0)
        partial = jnp.sum(per_sample)
        out_ref[...] = jnp.broadcast_to(partial, (1, 8, 128)).astype(jnp.float32)


def _vmem_capacity_bytes():
    try:
        return int(pltpu.get_tpu_info().vmem_capacity_bytes)
    except Exception:
        return 64 << 20    # conservative (v7x-style per-core VMEM)


def _round_up(x, m):
    return -(-x // m) * m


def heloss(logits, labels, cm, *, tile_n=None, tile_c=None):
    """logits: [N, C] float (any float dtype), labels: [N] int in [0, C), cm: scalar."""
    n, c = logits.shape
    itemsize = jnp.dtype(logits.dtype).itemsize

    vmem_phys = _vmem_capacity_bytes()
    # native-dtype bytes per logits block; leaves headroom for the f32
    # intermediates (x, e) plus the 2x double-buffered input under the limit.
    target = (4 << 20) if vmem_phys >= (128 << 20) else (2 << 20)

    if tile_c is None:
        if c * itemsize * 8 <= target:
            tile_c = c                               # whole class dim in one block
        else:
            tile_c = max(128, (target // (8 * itemsize)) // 128 * 128)
            tile_c = min(tile_c, _round_up(c, 128))
    if tile_c != c:
        assert tile_c % 128 == 0, "class-chunk size must be a multiple of 128"
    num_c = -(-c // tile_c)

    if tile_n is None:
        tile_n = max(8, min(1024, target // (tile_c * itemsize)))
    tile_n = max(8, (int(tile_n) // 8) * 8)
    # keep ~8+ batch tiles when N allows, so both v7x TensorCores get work
    tile_n = min(tile_n, max(8, _round_up(-(-n // 8), 8)))
    tile_n = min(tile_n, _round_up(n, 8))
    num_n = -(-n // tile_n)

    mask_cols = (c % tile_c) != 0
    mask_rows = (n % tile_n) != 0

    labels_2d = labels.astype(jnp.int32).reshape(n, 1)
    cm_arr = jnp.asarray(cm, dtype=jnp.float32).reshape(1)

    kernel = functools.partial(
        _heloss_kernel, n_true=n, c_true=c, tile_n=tile_n, tile_c=tile_c,
        num_c=num_c, mask_cols=mask_cols, mask_rows=mask_rows)

    cost = pl.CostEstimate(
        flops=6 * n * c,
        transcendentals=n * c,
        bytes_accessed=n * c * itemsize + n * 4 + num_n * 8 * 128 * 4,
    )

    partials = pl.pallas_call(
        kernel,
        grid=(num_n, num_c),
        out_shape=jax.ShapeDtypeStruct((num_n, 8, 128), jnp.float32),
        in_specs=[
            pl.BlockSpec(memory_space=pltpu.MemorySpace.SMEM),       # cm scalar
            pl.BlockSpec((tile_n, 1), lambda i, j: (i, 0)),          # labels tile
            pl.BlockSpec((tile_n, tile_c), lambda i, j: (i, j)),     # logits tile
        ],
        out_specs=pl.BlockSpec((1, 8, 128), lambda i, j: (i, 0, 0)),  # per-tile partial
        scratch_shapes=[
            pltpu.VMEM((tile_n, 1), jnp.float32),   # running max (scaled)
            pltpu.VMEM((tile_n, 1), jnp.float32),   # running sum of exp
            pltpu.VMEM((tile_n, 1), jnp.float32),   # target logit
        ],
        compiler_params=pltpu.CompilerParams(
            dimension_semantics=("parallel", "arbitrary"),
            vmem_limit_bytes=min(96 << 20, (vmem_phys * 3) // 4),
        ),
        cost_estimate=cost,
    )(cm_arr, labels_2d, logits)

    return -(jnp.sum(partials[:, 0, 0]) / n)


def heloss_ref(logits, labels, cm):
    """Pure-JAX reference mirroring the PyTorch forward exactly (naive form)."""
    n, c = logits.shape
    lf = logits.astype(jnp.float32)
    target = lf[jnp.arange(n), labels]                               # (N,)
    numerator = S_SCALE * (target - cm)                              # (N,)
    mask = jax.nn.one_hot(labels, c, dtype=bool)                     # (N, C)
    sum_excl = jnp.sum(jnp.where(mask, 0.0, jnp.exp(S_SCALE * lf)), axis=1)
    denominator = jnp.exp(numerator) + sum_excl
    return -jnp.mean(numerator - jnp.log(denominator))


if __name__ == "__main__":
    key = jax.random.PRNGKey(0)
    k1, k2, k3, k4, k5, k6 = jax.random.split(key, 6)
    cm = 0.35

    # Case 1: single block, class dim not a multiple of 128 (no padding anywhere)
    N1, C1 = 8, 32
    logits1 = jax.random.uniform(k1, (N1, C1), minval=-1.0, maxval=1.0, dtype=jnp.float32)
    labels1 = jax.random.randint(k2, (N1,), 0, C1, dtype=jnp.int32)
    loss1 = jax.block_until_ready(heloss(logits1, labels1, cm))
    ref1 = heloss_ref(logits1, labels1, cm)
    assert jnp.allclose(loss1, ref1, rtol=1e-4, atol=1e-5), (loss1, ref1)

    # Case 2: multiple batch tiles with a batch remainder (20 rows, tile_n=8 -> 3 tiles)
    N2, C2 = 20, 200
    logits2 = jax.random.uniform(k3, (N2, C2), minval=-1.0, maxval=1.0, dtype=jnp.float32)
    labels2 = jax.random.randint(k4, (N2,), 0, C2, dtype=jnp.int32)
    loss2 = jax.block_until_ready(heloss(logits2, labels2, cm, tile_n=8))
    ref2 = heloss_ref(logits2, labels2, cm)
    assert jnp.allclose(loss2, ref2, rtol=1e-4, atol=1e-5), (loss2, ref2)

    # Case 3: chunked class axis (tile_c=128 over C=200 -> 2 chunks, partial last chunk)
    N3, C3 = 16, 200
    logits3 = jax.random.uniform(k5, (N3, C3), minval=-1.0, maxval=1.0, dtype=jnp.float32)
    labels3 = jax.random.randint(k6, (N3,), 0, C3, dtype=jnp.int32)
    loss3 = jax.block_until_ready(heloss(logits3, labels3, cm, tile_n=8, tile_c=128))
    ref3 = heloss_ref(logits3, labels3, cm)
    assert jnp.allclose(loss3, ref3, rtol=1e-4, atol=1e-5), (loss3, ref3)

    print("KERNEL_OK")
</pallas_src>

<mosaic_0001>
module attributes {stable_mosaic.version = 11 : i64} {
  func.func @_heloss_kernel(%arg0: i32, %arg1: i32, %arg2: memref<1xf32, #tpu.memory_space<smem>>, %arg3: memref<8x1xi32, #tpu.memory_space<vmem>>, %arg4: memref<8x32xf32, #tpu.memory_space<vmem>>, %arg5: memref<1x8x128xf32, #tpu.memory_space<vmem>>, %arg6: memref<8x1xf32, #tpu.memory_space<vmem>>, %arg7: memref<8x1xf32, #tpu.memory_space<vmem>>, %arg8: memref<8x1xf32, #tpu.memory_space<vmem>>) attributes {dimension_semantics = [#tpu.dimension_semantics<parallel>, #tpu.dimension_semantics<arbitrary>], iteration_bounds = array<i64: 1, 1>, scalar_prefetch = 0 : i64, scratch_operands = 3 : i64, tpu.core_type = #tpu.core_type<tc>, window_params = [{transform_indices = @transform_0, window_bounds = array<i64: 1>}, {transform_indices = @transform_1, window_bounds = array<i64: 8, 1>}, {transform_indices = @transform_2, window_bounds = array<i64: 8, 32>}, {transform_indices = @transform_3, window_bounds = array<i64: 1, 8, 128>}]} {
    %c0_i32 = arith.constant 0 : i32
    %0 = arith.cmpi eq, %arg1, %c0_i32 : i32
    %1 = arith.extui %0 : i1 to i32
    %c0_i32_0 = arith.constant 0 : i32
    %2 = arith.cmpi ne, %1, %c0_i32_0 : i32
    scf.if %2 {
      %cst_23 = arith.constant 0xFF800000 : f32
      %38 = vector.broadcast %cst_23 : f32 to vector<8x1xf32>
      %c0_24 = arith.constant 0 : index
      %c0_25 = arith.constant 0 : index
      %39 = vector.load %arg6[%c0_24, %c0_25] : memref<8x1xf32, #tpu.memory_space<vmem>>, vector<8x1xf32>
      tpu.vector_store %arg6[%c0_24, %c0_25], %38 {strides = array<i32>} : memref<8x1xf32, #tpu.memory_space<vmem>>, vector<8x1xf32>,
      %cst_26 = arith.constant 0.000000e+00 : f32
      %40 = vector.broadcast %cst_26 : f32 to vector<8x1xf32>
      %c0_27 = arith.constant 0 : index
      %c0_28 = arith.constant 0 : index
      %41 = vector.load %arg7[%c0_27, %c0_28] : memref<8x1xf32, #tpu.memory_space<vmem>>, vector<8x1xf32>
      tpu.vector_store %arg7[%c0_27, %c0_28], %40 {strides = array<i32>} : memref<8x1xf32, #tpu.memory_space<vmem>>, vector<8x1xf32>,
      %cst_29 = arith.constant 0.000000e+00 : f32
      %42 = vector.broadcast %cst_29 : f32 to vector<8x1xf32>
      %c0_30 = arith.constant 0 : index
      %c0_31 = arith.constant 0 : index
      %43 = vector.load %arg8[%c0_30, %c0_31] : memref<8x1xf32, #tpu.memory_space<vmem>>, vector<8x1xf32>
      tpu.vector_store %arg8[%c0_30, %c0_31], %42 {strides = array<i32>} : memref<8x1xf32, #tpu.memory_space<vmem>>, vector<8x1xf32>,
    } else {
    }
    %c0 = arith.constant 0 : index
    %c0_1 = arith.constant 0 : index
    %3 = vector.load %arg4[%c0, %c0_1] : memref<8x32xf32, #tpu.memory_space<vmem>>, vector<8x32xf32>
    %c0_2 = arith.constant 0 : index
    %c0_3 = arith.constant 0 : index
    %4 = vector.load %arg3[%c0_2, %c0_3] : memref<8x1xi32, #tpu.memory_space<vmem>>, vector<8x1xi32>
    %5 = tpu.iota {dimensions = array<i32: 1>} : vector<8x32xi32>
    %6 = vector.broadcast %4 : vector<8x1xi32> to vector<8x32xi32>
    %7 = arith.cmpi eq, %5, %6 : vector<8x32xi32>
    %cst = arith.constant 0.000000e+00 : f32
    %8 = vector.broadcast %cst : f32 to vector<8x32xf32>
    %9 = arith.select %7, %3, %8 : vector<8x32xi1>, vector<8x32xf32>
    %cst_4 = arith.constant dense<0.000000e+00> : vector<8xf32>
    %10 = vector.multi_reduction <add>, %9, %cst_4 [1] : vector<8x32xf32> to vector<8xf32>
    %11 = vector.shape_cast %10 : vector<8xf32> to vector<8x1xf32>
    %c0_5 = arith.constant 0 : index
    %c0_6 = arith.constant 0 : index
    %12 = vector.load %arg6[%c0_5, %c0_6] : memref<8x1xf32, #tpu.memory_space<vmem>>, vector<8x1xf32>
    %cst_7 = arith.constant dense<0xFF800000> : vector<8xf32>
    %13 = vector.multi_reduction <maximumf>, %3, %cst_7 [1] : vector<8x32xf32> to vector<8xf32>
    %14 = vector.shape_cast %13 : vector<8xf32> to vector<8x1xf32>
    %cst_8 = arith.constant 1.500000e+01 : f32
    %15 = vector.broadcast %cst_8 : f32 to vector<8x1xf32>
    %16 = arith.mulf %15, %14 : vector<8x1xf32>
    %17 = arith.maximumf %12, %16 : vector<8x1xf32>
    %cst_9 = arith.constant 1.500000e+01 : f32
    %18 = vector.broadcast %cst_9 : f32 to vector<8x32xf32>
    %19 = arith.mulf %18, %3 : vector<8x32xf32>
    %20 = vector.broadcast %17 : vector<8x1xf32> to vector<8x32xf32>
    %21 = arith.subf %19, %20 : vector<8x32xf32>
    %22 = math.exp %21 : vector<8x32xf32>
    %23 = arith.subf %12, %17 : vector<8x1xf32>
    %24 = math.exp %23 : vector<8x1xf32>
    %c0_10 = arith.constant 0 : index
    %c0_11 = arith.constant 0 : index
    %25 = vector.load %arg7[%c0_10, %c0_11] : memref<8x1xf32, #tpu.memory_space<vmem>>, vector<8x1xf32>
    %26 = arith.mulf %24, %25 : vector<8x1xf32>
    %cst_12 = arith.constant dense<0.000000e+00> : vector<8xf32>
    %27 = vector.multi_reduction <add>, %22, %cst_12 [1] : vector<8x32xf32> to vector<8xf32>
    %28 = vector.shape_cast %27 : vector<8xf32> to vector<8x1xf32>
    %29 = arith.addf %26, %28 : vector<8x1xf32>
    %c0_13 = arith.constant 0 : index
    %c0_14 = arith.constant 0 : index
    %30 = vector.load %arg7[%c0_13, %c0_14] : memref<8x1xf32, #tpu.memory_space<vmem>>, vector<8x1xf32>
    tpu.vector_store %arg7[%c0_13, %c0_14], %29 {strides = array<i32>} : memref<8x1xf32, #tpu.memory_space<vmem>>, vector<8x1xf32>,
    %c0_15 = arith.constant 0 : index
    %c0_16 = arith.constant 0 : index
    %31 = vector.load %arg6[%c0_15, %c0_16] : memref<8x1xf32, #tpu.memory_space<vmem>>, vector<8x1xf32>
    tpu.vector_store %arg6[%c0_15, %c0_16], %17 {strides = array<i32>} : memref<8x1xf32, #tpu.memory_space<vmem>>, vector<8x1xf32>,
    %c0_17 = arith.constant 0 : index
    %c0_18 = arith.constant 0 : index
    %32 = vector.load %arg8[%c0_17, %c0_18] : memref<8x1xf32, #tpu.memory_space<vmem>>, vector<8x1xf32>
    %33 = arith.addf %32, %11 : vector<8x1xf32>
    %c0_19 = arith.constant 0 : index
    %c0_20 = arith.constant 0 : index
    %34 = vector.load %arg8[%c0_19, %c0_20] : memref<8x1xf32, #tpu.memory_space<vmem>>, vector<8x1xf32>
    tpu.vector_store %arg8[%c0_19, %c0_20], %33 {strides = array<i32>} : memref<8x1xf32, #tpu.memory_space<vmem>>, vector<8x1xf32>,
    %c0_i32_21 = arith.constant 0 : i32
    %35 = arith.cmpi eq, %arg1, %c0_i32_21 : i32
    %36 = arith.extui %35 : i1 to i32
    %c0_i32_22 = arith.constant 0 : i32
    %37 = arith.cmpi ne, %36, %c0_i32_22 : i32
    scf.if %37 {
      %c0_23 = arith.constant 0 : index
      %c0_24 = arith.constant 0 : index
      %38 = vector.load %arg8[%c0_23, %c0_24] : memref<8x1xf32, #tpu.memory_space<vmem>>, vector<8x1xf32>
      %c0_25 = arith.constant 0 : index
      %c0_26 = arith.constant 0 : index
      %39 = vector.load %arg6[%c0_25, %c0_26] : memref<8x1xf32, #tpu.memory_space<vmem>>, vector<8x1xf32>
      %c0_27 = arith.constant 0 : index
      %c0_28 = arith.constant 0 : index
      %40 = vector.load %arg7[%c0_27, %c0_28] : memref<8x1xf32, #tpu.memory_space<vmem>>, vector<8x1xf32>
      %c0_29 = arith.constant 0 : index
      %41 = memref.load %arg2[%c0_29] : memref<1xf32, #tpu.memory_space<smem>>
      %42 = vector.broadcast %41 : f32 to vector<8x1xf32>
      %43 = arith.subf %38, %42 : vector<8x1xf32>
      %cst_30 = arith.constant 1.500000e+01 : f32
      %44 = vector.broadcast %cst_30 : f32 to vector<8x1xf32>
      %45 = arith.mulf %44, %43 : vector<8x1xf32>
      %cst_31 = arith.constant 1.500000e+01 : f32
      %46 = vector.broadcast %cst_31 : f32 to vector<8x1xf32>
      %47 = arith.mulf %46, %38 : vector<8x1xf32>
      %48 = arith.subf %47, %39 : vector<8x1xf32>
      %49 = math.exp %48 : vector<8x1xf32>
      %50 = arith.subf %40, %49 : vector<8x1xf32>
      %cst_32 = arith.constant 0.000000e+00 : f32
      %51 = vector.broadcast %cst_32 : f32 to vector<8x1xf32>
      %52 = arith.maximumf %50, %51 : vector<8x1xf32>
      %53 = arith.maximumf %45, %39 : vector<8x1xf32>
      %54 = arith.subf %45, %53 : vector<8x1xf32>
      %55 = math.exp %54 : vector<8x1xf32>
      %56 = arith.subf %39, %53 : vector<8x1xf32>
      %57 = math.exp %56 : vector<8x1xf32>
      %58 = arith.mulf %57, %52 : vector<8x1xf32>
      %59 = arith.addf %55, %58 : vector<8x1xf32>
      %60 = math.log %59 : vector<8x1xf32>
      %61 = arith.addf %53, %60 : vector<8x1xf32>
      %62 = arith.subf %45, %61 : vector<8x1xf32>
      %63 = vector.shape_cast %62 : vector<8x1xf32> to vector<1x8x1xf32>
      %cst_33 = arith.constant dense<0.000000e+00> : vector<1xf32>
      %64 = vector.multi_reduction <add>, %63, %cst_33 [1, 2] : vector<1x8x1xf32> to vector<1xf32>
      %65 = vector.shape_cast %64 : vector<1xf32> to vector<1x1x1xf32>
      %66 = vector.extract %65[0, 0, 0] : f32 from vector<1x1x1xf32>
      %67 = vector.broadcast %66 : f32 to vector<1x8x128xf32>
      %c0_34 = arith.constant 0 : index
      %c0_35 = arith.constant 0 : index
      %c0_36 = arith.constant 0 : index
      %68 = vector.load %arg5[%c0_34, %c0_35, %c0_36] : memref<1x8x128xf32, #tpu.memory_space<vmem>>, vector<1x8x128xf32>
      tpu.vector_store %arg5[%c0_34, %c0_35, %c0_36], %67 {strides = array<i32>} : memref<1x8x128xf32, #tpu.memory_space<vmem>>, vector<1x8x128xf32>,
    } else {
    }
    return
  }
  func.func @transform_0(%arg0: i32, %arg1: i32) -> i32 {
    %c0_i32 = arith.constant 0 : i32
    %c0_i32_0 = arith.constant 0 : i32
    return %c0_i32 : i32
  }
  func.func @transform_1(%arg0: i32, %arg1: i32) -> (i32, i32) {
    %c0_i32 = arith.constant 0 : i32
    %c0_i32_0 = arith.constant 0 : i32
    return %arg0, %c0_i32 : i32, i32
  }
  func.func @transform_2(%arg0: i32, %arg1: i32) -> (i32, i32) {
    %c0_i32 = arith.constant 0 : i32
    return %arg0, %arg1 : i32, i32
  }
  func.func @transform_3(%arg0: i32, %arg1: i32) -> (i32, i32, i32) {
    %c0_i32 = arith.constant 0 : i32
    %c0_i32_0 = arith.constant 0 : i32
    %c0_i32_1 = arith.constant 0 : i32
    return %arg0, %c0_i32, %c0_i32_0 : i32, i32, i32
  }
}

</mosaic_0001>

<llo_original>
// kernel: tpu_custom_call.1
$region0: #{tpu_custom_call.1}
  #allocation0 [shape = 'u32[]', space=smem, size = 0x4, offset = 0x4, fixed_abs, tag = 'smem constant byte address 0x4 - core index']
  #allocation1 [shape = 'u32[144,128]{1,0:T(1,128)}', space=vmem, size = 0x12000, scoped, tag = 'internal scratch']
  #allocation2 [shape = 'f32[8,1]{1,0:T(8,128)}', space=vmem, size = 0x1000, scoped, tag = 'scratch operand']
  #allocation3 [shape = 'f32[8,1]{1,0:T(8,128)}', space=vmem, size = 0x1000, scoped, tag = 'scratch operand']
  #allocation4 [shape = 'f32[8,1]{1,0:T(8,128)}', space=vmem, size = 0x1000, scoped, tag = 'scratch operand']
  #allocation5 [shape = 'f32[1]{0:T(128)S(6)}', space=smem, size = 0x200, scoped, tag = 'scoped memory for tpu_custom_call.1']
  %s0 = inlined_call_operand.<no memory space> [shape: f32[1], index: 0, kind: input, shape index: {}]
  %s1 = inlined_call_operand.vmem [shape: s32[8,1], index: 1, kind: input, shape index: {}]
  %s2 = inlined_call_operand.vmem [shape: f32[8,32], index: 2, kind: input, shape index: {}]
  %s3 = inlined_call_operand.hbm [shape: f32[1,8,128], index: 3, kind: output, shape index: {}]
  %s4 = sld [smem:[#allocation0]]
  $region30: #{tpu_custom_call.1} parent=0
    _
  %s6 = ssub.s32 1, %s4
  %s7 = scalar_select 0, %s6, %s4
  %8 = sst [smem:[#allocation5]] %s0
  $region1: #{tpu_custom_call.1} parent=0
    #allocation6 [shape = 'u8[4096]{0}', space=vmem, size = 0x1000, scoped, tag = 'output window, operand 0, single buffered']
    #allocation7 [shape = 's32[1]{0}', space=sflag, size = 0x4, scoped, tag = 'scoped memory for tpu_custom_call.1']
    %9 = vsyncpa [#allocation7], 0
    // Predicated region
    $region2: #{tpu_custom_call.1} parent=1 // pred_check
      _
    $region3: #{tpu_custom_call.1} parent=1 // pred_check_branch
      %11 = sbr.rel (0) target = $region5
    $region4: #{tpu_custom_call.1} parent=1 // pred_region
      _
    $region5: #{tpu_custom_call.1} parent=1 // pred_fallthru
      _
    // Predicated region
    $region6: #{tpu_custom_call.1} parent=1 // pred_check
      _
    $region7: #{tpu_custom_call.1} parent=1 // pred_check_branch
      %13 = sbr.rel (0) target = $region9
    $region8: #{tpu_custom_call.1} parent=1 // pred_region
      _
    $region9: #{tpu_custom_call.1} parent=1 // pred_fallthru
      _
    // Predicated region
    $region10: #{tpu_custom_call.1} parent=1 // pred_check
      _
    $region11: #{tpu_custom_call.1} parent=1 // pred_check_branch
      %15 = sbr.rel (0) target = $region13
    $region12: #{tpu_custom_call.1} parent=1 // pred_region
      _
    $region13: #{tpu_custom_call.1} parent=1 // pred_fallthru
      _
    %p16 = scmp.eq.s32.totalorder 0, 0
    // Predicated region
    $region14: #{tpu_custom_call.1} parent=1 // pred_check
      %p17 = pneg %p16
    $region15: #{tpu_custom_call.1} parent=1 // pred_check_branch
      %19 = sbr.rel (%p17) target = $region17
    $region16: #{tpu_custom_call.1} parent=1 // pred_region
      %vm20 = vcmask 7168
      %21 = vst.msk [vmem:[#allocation2] sm:$0xff] %vm20, -inf
      %22 = vst.msk [vmem:[#allocation3] sm:$0xff] %vm20, 0.0
      %23 = vst.msk [vmem:[#allocation4] sm:$0xff] %vm20, 0.0
    $region17: #{tpu_custom_call.1} parent=1 // pred_fallthru
      _
    %v24 = vld [vmem:[%s2] sm:$0xff]
    %v25 = vld [vmem:[%s1] sm:$0xff]
    %v26 = vlaneseq
    %v27 = vand.u32 %v26, 127
    %28 = vset.pattern.permute.xlu0 0
    %29 = vperm.xlu0 %28, %v25
    %v30 = vpop.permute.xlu0 %29
    %vm31 = vcmp.eq.s32.totalorder %v27, %v30
    %v32 = vsel %vm31, %v24, 0.0
    %vm33 = vcmask 261120
    %v34 = vsel %vm33, %v32, 0.0
    %35 = vadd.xlane.f32.xlu0 %v34
    %v36 = vpop.xlane.xlu0 %35
    %v37 = vld [vmem:[#allocation2] sm:$0xff]
    %v38 = vsel %vm33, %v24, -inf
    %39 = vmax.xlane.f32.xlu0 %v38
    %v40 = vpop.xlane.xlu0 %39
    %v41 = vmul.f32 %v40, 15.0
    %v42 = vmax.f32 %v37, %v41
    %v43 = vmul.f32 %v24, 15.0
    %45 = vset.pattern.permute.xlu0 0
    %46 = vperm.xlu0 %45, %v42
    %v47 = vpop.permute.xlu0 %46
    %v49 = vsub.f32 %v43, %v47
    %v50 = vmul.f32 %v49, 1.442695
    %v51 = vpow.pop %v50
    %v52 = vsub.f32 %v37, %v42
    %v53 = vmul.f32 %v52, 1.442695
    %v54 = vpow.pop %v53
    %v55 = vld [vmem:[#allocation3] sm:$0xff]
    %v56 = vmul.f32 %v54, %v55
    %v57 = vsel %vm33, %v51, 0.0
    %58 = vadd.xlane.f32.xlu0 %v57
    %v59 = vpop.xlane.xlu0 %58
    %v60 = vadd.f32 %v56, %v59
    %vm61 = vcmask 7168
    %62 = vst.msk [vmem:[#allocation3] sm:$0xff] %vm61, %v60
    %63 = vst.msk [vmem:[#allocation2] sm:$0xff] %vm61, %v42
    %v64 = vld [vmem:[#allocation4] sm:$0xff]
    %v65 = vadd.f32 %v64, %v36
    %66 = vst.msk [vmem:[#allocation4] sm:$0xff] %vm61, %v65
    // Predicated region
    $region18: #{tpu_custom_call.1} parent=1 // pred_check
      %p67 = pneg %p16
    $region19: #{tpu_custom_call.1} parent=1 // pred_check_branch
      %69 = sbr.rel (%p67) target = $region21
    $region20: #{tpu_custom_call.1} parent=1 // pred_region
      %v70 = vld [vmem:[#allocation4] sm:$0xff]
      %v71 = vld [vmem:[#allocation2] sm:$0xff]
      %v72 = vld [vmem:[#allocation3] sm:$0xff]
      %s73 = sld [smem:[#allocation5]]
      %v74 = vstv %s73
      %v75 = vsub.f32 %v70, %v74
      %v76 = vmul.f32 %v75, 15.0
      %v77 = vmul.f32 %v70, 15.0
      %v78 = vsub.f32 %v77, %v71
      %v79 = vmul.f32 %v78, 1.442695
      %v80 = vpow.pop %v79
      %v81 = vsub.f32 %v72, %v80
      %v82 = vmax.f32 %v81, 0.0
      %v83 = vmax.f32 %v76, %v71
      %v84 = vsub.f32 %v76, %v83
      %v85 = vmul.f32 %v84, 1.442695
      %v86 = vpow.pop %v85
      %v87 = vsub.f32 %v71, %v83
      %v88 = vmul.f32 %v87, 1.442695
      %v89 = vpow.pop %v88
      %v90 = vmul.f32 %v89, %v82
      %v91 = vadd.f32 %v86, %v90
      %v92 = vlog2.pop %v91
      %v93 = vmul.f32 %v92, 0.6931472
      %v94 = vadd.f32 %v83, %v93
      %v95 = vsub.f32 %v76, %v94
      %v96 = vsel %vm61, %v95, 0.0
      %97 = vadd.xlane.f32.xlu0 %v96
      %v98 = vpop.xlane.xlu0 %97
      %v99 = vrot.slane %v98, 4
      %v100 = vadd.f32 %v98, %v99
      %v101 = vrot.slane %v100, 2
      %v102 = vadd.f32 %v100, %v101
      %v103 = vrot.slane %v102, 1
      %v104 = vadd.f32 %v102, %v103
      %s105 = vtos %v104
      %v106 = vstv %s105
      %107 = vst [vmem:[#allocation6] sm:$0xff] %v106
    $region21: #{tpu_custom_call.1} parent=1 // pred_fallthru
      _
    // Predicated region
    $region22: #{tpu_custom_call.1} parent=1 // pred_check
      _
    $region23: #{tpu_custom_call.1} parent=1 // pred_check_branch
      %109 = sbr.rel (0) target = $region25
    $region24: #{tpu_custom_call.1} parent=1 // pred_region
      %s111 = ssub.s32 128, 128
      %112 = vsyncadd [#allocation7], %s111
      %s114 = sshll.u32 [#allocation6], 4
      %s115 = int_to_ptr.vmem [resolvable:$true] %s114
      %117 = dma.vmem_to_hbm [thread:$0]  %s115, 128, %s3, [#allocation7]
    $region25: #{tpu_custom_call.1} parent=1 // pred_fallthru
      _
    // Predicated region
    $region26: #{tpu_custom_call.1} parent=1 // pred_check
      _
    $region27: #{tpu_custom_call.1} parent=1 // pred_check_branch
      %119 = sbr.rel (0) target = $region29
    $region28: #{tpu_custom_call.1} parent=1 // pred_region
      %120 = dma.done [#allocation7], 128
    $region29: #{tpu_custom_call.1} parent=1 // pred_fallthru
      _
    %121 = vsyncpa [#allocation7], 1

</llo_original>
